<compile_context>
chip_gen: v5e
topology: v5e:2x2
jax: 0.10.0
libtpu: 0.0.40
codegen_flags: <defaults>
</compile_context>

<pallas_src>
import functools

import jax
import jax.numpy as jnp
from jax.experimental import pallas as pl
from jax.experimental.pallas import tpu as pltpu

IN_DIM = 10
HID_DIM = 32
OUT_DIM = 1


def _mlp_kernel(z_ref, w1t_ref, b1_ref, w2_ref, b2_ref, o_ref, *, mxu_dtype):
    # z_ref  : [tb, 10]   VMEM  (batch-major input tile, any float dtype)
    # w1t_ref: [32, 10]   VMEM  (W1 pre-transposed + pre-cast in the wrapper)
    # b1_ref : [32, 1]    VMEM  (layer-1 bias as a column; broadcasts over lanes)
    # w2_ref : [32, 1]    VMEM  (layer-2 weight as a column)
    # b2_ref : [1, 1]     SMEM  (scalar bias)
    # o_ref  : [1, 1, tb] VMEM  (lane-dense output row for this tile)
    z = z_ref[...].astype(mxu_dtype)                         # [tb, 10]
    # Layer 1, batch-in-lanes: hT = W1^T @ z^T as an NT matmul (contract both
    # minor dims) -> Mosaic needs no explicit relayout of z or h.
    hT = jax.lax.dot_general(
        w1t_ref[...], z,
        dimension_numbers=(((1,), (1,)), ((), ())),
        preferred_element_type=jnp.float32)                  # [32, tb] f32 (MXU)
    hT = jnp.maximum(hT + b1_ref[...], 0.0)                  # bias + ReLU (VPU), lane-dense
    # Layer 2: multiply (VPU) + sublane reduce (XLU) -> already lane-dense [1, tb].
    y = jnp.sum(hT * w2_ref[...], axis=0, keepdims=True) + b2_ref[0, 0]
    o_ref[0] = y.astype(o_ref.dtype)


def _round_up(x, m):
    return ((x + m - 1) // m) * m


def _vmem_capacity_bytes():
    try:
        return int(pltpu.get_tpu_info().vmem_capacity_bytes)
    except Exception:
        return 64 * 1024 * 1024  # conservative: assume the smallest (v7x) VMEM


def _choose_tiling(B, cap):
    """Pick a 128-aligned batch tile tb and the padded batch B_pad (tb | B_pad)."""
    if B <= cap:
        tb = max(128, _round_up(B, 128))
        return tb, tb
    # Pad to a friendly multiple, then take the largest 128-aligned divisor <= cap.
    B_pad = _round_up(B, 1024)
    tb = 128
    t = 128
    while t <= cap:
        if B_pad % t == 0:
            tb = t
        t += 128
    return tb, B_pad


def latent_predictor_x11(z, w1, b1, w2, b2, *, tb=None, mxu_dtype=jnp.bfloat16):
    """z: [B, 10] float -> [B, 1] float32.  w1 stored [in, out] = [10, 32]."""
    B = z.shape[0]
    assert z.shape[1] == IN_DIM

    vmem_cap = _vmem_capacity_bytes()
    small_vmem = vmem_cap < 96 * 1024 * 1024          # v7x (64 MiB) vs v5e/v6e (128 MiB)
    cap = 8192 if small_vmem else 16384               # [tb,10] lane-pads to 512 B/row in VMEM
    vmem_limit = (40 if small_vmem else 64) * 1024 * 1024

    if tb is None:
        tb, B_pad = _choose_tiling(B, cap)
    else:
        assert tb % 128 == 0, "tb must be a multiple of 128 for unmasked lane stores"
        B_pad = _round_up(B, tb)
    nt = B_pad // tb

    z_p = z if B_pad == B else jnp.pad(z, ((0, B_pad - B), (0, 0)))

    w1t = jnp.asarray(w1.T, dtype=mxu_dtype)          # [32, 10], cast once in the wrapper
    b1_col = b1.reshape(HID_DIM, 1).astype(jnp.float32)
    w2_col = w2.reshape(HID_DIM, 1).astype(jnp.float32)
    b2_2d = b2.reshape(1, 1).astype(jnp.float32)

    cost = pl.CostEstimate(
        flops=2 * B_pad * IN_DIM * HID_DIM + 2 * B_pad * HID_DIM * OUT_DIM,
        transcendentals=0,
        bytes_accessed=int(z_p.size) * z_p.dtype.itemsize
        + 4 * B_pad * OUT_DIM
        + int(w1t.size) * w1t.dtype.itemsize
        + 4 * (int(b1.size) + int(w2.size) + int(b2.size)),
    )

    out = pl.pallas_call(
        functools.partial(_mlp_kernel, mxu_dtype=mxu_dtype),
        out_shape=jax.ShapeDtypeStruct((nt, 1, tb), jnp.float32),
        grid_spec=pltpu.PrefetchScalarGridSpec(
            num_scalar_prefetch=0,
            grid=(nt,),
            in_specs=[
                pl.BlockSpec((tb, IN_DIM), lambda i: (i, 0)),          # z tile (streamed)
                pl.BlockSpec((HID_DIM, IN_DIM), lambda i: (0, 0)),     # W1^T (resident)
                pl.BlockSpec((HID_DIM, 1), lambda i: (0, 0)),          # b1 column
                pl.BlockSpec((HID_DIM, 1), lambda i: (0, 0)),          # W2 column
                pl.BlockSpec(memory_space=pltpu.MemorySpace.SMEM),     # b2 scalar
            ],
            out_specs=pl.BlockSpec((1, 1, tb), lambda i: (i, 0, 0)),   # lane-dense row
        ),
        compiler_params=pltpu.CompilerParams(
            dimension_semantics=("parallel",),
            vmem_limit_bytes=vmem_limit,
        ),
        cost_estimate=cost,
    )(z_p, w1t, b1_col, w2_col, b2_2d)

    # (nt, 1, tb) row-major == batch order; free metadata reshape + slice off pad.
    return out.reshape(B_pad, OUT_DIM)[:B]


def init_params(key):
    """Deterministic init matching nn.Linear shapes (stored as [in, out])."""
    k1, k2, k3, k4 = jax.random.split(key, 4)
    lim1 = 1.0 / jnp.sqrt(IN_DIM)
    lim2 = 1.0 / jnp.sqrt(HID_DIM)
    w1 = jax.random.uniform(k1, (IN_DIM, HID_DIM), jnp.float32, -lim1, lim1)
    b1 = jax.random.uniform(k2, (HID_DIM,), jnp.float32, -lim1, lim1)
    w2 = jax.random.uniform(k3, (HID_DIM, OUT_DIM), jnp.float32, -lim2, lim2)
    b2 = jax.random.uniform(k4, (OUT_DIM,), jnp.float32, -lim2, lim2)
    return w1, b1, w2, b2


def reference(z, w1, b1, w2, b2):
    h = jnp.maximum(z @ w1 + b1, 0.0)
    return h @ w2 + b2


if __name__ == "__main__":
    key = jax.random.PRNGKey(0)
    kz, kp = jax.random.split(key)
    w1, b1, w2, b2 = init_params(kp)

    # Tolerance note: the default path feeds the MXU bf16 operands (f32 accumulation),
    # and the jnp reference itself may run TPU matmuls at default (bf16) precision,
    # so both checks use a bf16-safe tolerance.
    TOL = dict(atol=2e-2, rtol=2e-2)

    # 1) Small single-tile case (B=8 pads to one 128-row tile), default bf16 MXU feed.
    B1 = 8
    z1 = jax.random.normal(kz, (B1, IN_DIM), jnp.float32)
    out1 = jax.block_until_ready(latent_predictor_x11(z1, w1, b1, w2, b2))
    ref1 = reference(z1, w1, b1, w2, b2)
    assert out1.shape == (B1, OUT_DIM)
    assert jnp.allclose(out1, ref1, **TOL), "mismatch vs reference (bf16 path)"

    # 2) Multi-tile grid (nt=3) with full-f32 MXU operands.
    B2 = 384
    z2 = jax.random.normal(jax.random.PRNGKey(1), (B2, IN_DIM), jnp.float32)
    out2 = jax.block_until_ready(
        latent_predictor_x11(z2, w1, b1, w2, b2, tb=128, mxu_dtype=jnp.float32))
    ref2 = reference(z2, w1, b1, w2, b2)
    assert out2.shape == (B2, OUT_DIM)
    assert jnp.allclose(out2, ref2, **TOL), "mismatch vs reference (f32 path)"

    print("KERNEL_OK")
</pallas_src>

<mosaic_0001>
module attributes {stable_mosaic.version = 11 : i64} {
  func.func @_mlp_kernel(%arg0: i32, %arg1: memref<128x10xf32, #tpu.memory_space<vmem>>, %arg2: memref<32x10xbf16, #tpu.memory_space<vmem>>, %arg3: memref<32x1xf32, #tpu.memory_space<vmem>>, %arg4: memref<32x1xf32, #tpu.memory_space<vmem>>, %arg5: memref<1x1xf32, #tpu.memory_space<smem>>, %arg6: memref<1x1x128xf32, #tpu.memory_space<vmem>>) attributes {dimension_semantics = [#tpu.dimension_semantics<parallel>], iteration_bounds = array<i64: 1>, scalar_prefetch = 0 : i64, scratch_operands = 0 : i64, tpu.core_type = #tpu.core_type<tc>, window_params = [{transform_indices = @transform_0, window_bounds = array<i64: 128, 10>}, {pipeline_mode = #tpu.pipeline_mode<synchronous>, transform_indices = @transform_1, window_bounds = array<i64: 32, 10>}, {pipeline_mode = #tpu.pipeline_mode<synchronous>, transform_indices = @transform_2, window_bounds = array<i64: 32, 1>}, {pipeline_mode = #tpu.pipeline_mode<synchronous>, transform_indices = @transform_3, window_bounds = array<i64: 32, 1>}, {transform_indices = @transform_4, window_bounds = array<i64: 1, 1>}, {transform_indices = @transform_5, window_bounds = array<i64: 1, 1, 128>}]} {
    %c0 = arith.constant 0 : index
    %c0_0 = arith.constant 0 : index
    %0 = vector.load %arg1[%c0, %c0_0] : memref<128x10xf32, #tpu.memory_space<vmem>>, vector<128x10xf32>
    %1 = arith.truncf %0 : vector<128x10xf32> to vector<128x10xbf16>
    %c0_1 = arith.constant 0 : index
    %c0_2 = arith.constant 0 : index
    %2 = vector.load %arg2[%c0_1, %c0_2] : memref<32x10xbf16, #tpu.memory_space<vmem>>, vector<32x10xbf16>
    %cst = arith.constant dense<0.000000e+00> : vector<32x128xf32>
    %3 = tpu.matmul %2, %1, %cst {dimension_numbers = #tpu.dot_dimension_numbers<[1], [1], [0], [0], [0, 0, 1, 0], [], []>} : vector<32x10xbf16>, vector<128x10xbf16>, vector<32x128xf32> -> vector<32x128xf32>
    %c0_3 = arith.constant 0 : index
    %c0_4 = arith.constant 0 : index
    %4 = vector.load %arg3[%c0_3, %c0_4] : memref<32x1xf32, #tpu.memory_space<vmem>>, vector<32x1xf32>
    %5 = vector.broadcast %4 : vector<32x1xf32> to vector<32x128xf32>
    %6 = arith.addf %3, %5 : vector<32x128xf32>
    %cst_5 = arith.constant 0.000000e+00 : f32
    %7 = vector.broadcast %cst_5 : f32 to vector<32x128xf32>
    %8 = arith.maximumf %6, %7 : vector<32x128xf32>
    %c0_6 = arith.constant 0 : index
    %c0_7 = arith.constant 0 : index
    %9 = vector.load %arg4[%c0_6, %c0_7] : memref<32x1xf32, #tpu.memory_space<vmem>>, vector<32x1xf32>
    %10 = vector.broadcast %9 : vector<32x1xf32> to vector<32x128xf32>
    %11 = arith.mulf %8, %10 : vector<32x128xf32>
    %cst_8 = arith.constant dense<0.000000e+00> : vector<128xf32>
    %12 = vector.multi_reduction <add>, %11, %cst_8 [0] : vector<32x128xf32> to vector<128xf32>
    %13 = vector.shape_cast %12 : vector<128xf32> to vector<1x128xf32>
    %c0_9 = arith.constant 0 : index
    %c0_10 = arith.constant 0 : index
    %14 = memref.load %arg5[%c0_9, %c0_10] : memref<1x1xf32, #tpu.memory_space<smem>>
    %15 = vector.broadcast %14 : f32 to vector<1x128xf32>
    %16 = arith.addf %13, %15 : vector<1x128xf32>
    %c0_11 = arith.constant 0 : index
    %c0_12 = arith.constant 0 : index
    %c0_13 = arith.constant 0 : index
    %17 = vector.load %arg6[%c0_11, %c0_12, %c0_13] : memref<1x1x128xf32, #tpu.memory_space<vmem>>, vector<1x1x128xf32>
    %18 = vector.shape_cast %17 : vector<1x1x128xf32> to vector<1x128xf32>
    %19 = vector.shape_cast %16 : vector<1x128xf32> to vector<1x1x128xf32>
    tpu.vector_store %arg6[%c0_11, %c0_12, %c0_13], %19 {strides = array<i32>} : memref<1x1x128xf32, #tpu.memory_space<vmem>>, vector<1x1x128xf32>,
    return
  }
  func.func @transform_0(%arg0: i32) -> (i32, i32) {
    %c0_i32 = arith.constant 0 : i32
    %c0_i32_0 = arith.constant 0 : i32
    return %arg0, %c0_i32 : i32, i32
  }
  func.func @transform_1(%arg0: i32) -> (i32, i32) {
    %c0_i32 = arith.constant 0 : i32
    %c0_i32_0 = arith.constant 0 : i32
    %c0_i32_1 = arith.constant 0 : i32
    return %c0_i32, %c0_i32_0 : i32, i32
  }
  func.func @transform_2(%arg0: i32) -> (i32, i32) {
    %c0_i32 = arith.constant 0 : i32
    %c0_i32_0 = arith.constant 0 : i32
    %c0_i32_1 = arith.constant 0 : i32
    return %c0_i32, %c0_i32_0 : i32, i32
  }
  func.func @transform_3(%arg0: i32) -> (i32, i32) {
    %c0_i32 = arith.constant 0 : i32
    %c0_i32_0 = arith.constant 0 : i32
    %c0_i32_1 = arith.constant 0 : i32
    return %c0_i32, %c0_i32_0 : i32, i32
  }
  func.func @transform_4(%arg0: i32) -> (i32, i32) {
    %c0_i32 = arith.constant 0 : i32
    %c0_i32_0 = arith.constant 0 : i32
    %c0_i32_1 = arith.constant 0 : i32
    return %c0_i32, %c0_i32_0 : i32, i32
  }
  func.func @transform_5(%arg0: i32) -> (i32, i32, i32) {
    %c0_i32 = arith.constant 0 : i32
    %c0_i32_0 = arith.constant 0 : i32
    %c0_i32_1 = arith.constant 0 : i32
    return %arg0, %c0_i32, %c0_i32_0 : i32, i32, i32
  }
}

</mosaic_0001>

<llo_original>
// kernel: tpu_custom_call.1
$region0: #{tpu_custom_call.1}
  #allocation0 [shape = 'u32[]', space=smem, size = 0x4, offset = 0x4, fixed_abs, tag = 'smem constant byte address 0x4 - core index']
  #allocation1 [shape = 'u32[72,128]{1,0:T(1,128)}', space=vmem, size = 0x9000, scoped, tag = 'internal scratch']
  #allocation2 [shape = 'f32[1,1]{1,0:T(1,128)S(6)}', space=smem, size = 0x200, scoped, tag = 'scoped memory for tpu_custom_call.1']
  %s0 = inlined_call_operand.vmem [shape: f32[128,10], index: 0, kind: input, shape index: {}]
  %s1 = inlined_call_operand.vmem [shape: bf16[32,10], index: 1, kind: input, shape index: {}]
  %s2 = inlined_call_operand.vmem [shape: f32[32,1], index: 2, kind: input, shape index: {}]
  %s3 = inlined_call_operand.vmem [shape: f32[32,1], index: 3, kind: input, shape index: {}]
  %s4 = inlined_call_operand.<no memory space> [shape: f32[1,1], index: 4, kind: input, shape index: {}]
  %s5 = inlined_call_operand.hbm [shape: f32[1,1,128], index: 5, kind: output, shape index: {}]
  %s6 = sld [smem:[#allocation0]]
  $region30: #{tpu_custom_call.1} parent=0
    _
  %s8 = ssub.s32 1, %s6
  %s9 = scalar_select 0, %s8, %s6
  %10 = sst [smem:[#allocation2]] %s4
  $region1: #{tpu_custom_call.1} parent=0
    #allocation3 [shape = 'u8[512]{0}', space=vmem, size = 0x400, scoped, tag = 'output window, operand 0, single buffered']
    #allocation4 [shape = 's32[1]{0}', space=sflag, size = 0x4, scoped, tag = 'scoped memory for tpu_custom_call.1']
    %11 = vsyncpa [#allocation4], 0
    // Predicated region
    $region2: #{tpu_custom_call.1} parent=1 // pred_check
      _
    $region3: #{tpu_custom_call.1} parent=1 // pred_check_branch
      %13 = sbr.rel (0) target = $region5
    $region4: #{tpu_custom_call.1} parent=1 // pred_region
      _
    $region5: #{tpu_custom_call.1} parent=1 // pred_fallthru
      _
    // Predicated region
    $region6: #{tpu_custom_call.1} parent=1 // pred_check
      _
    $region7: #{tpu_custom_call.1} parent=1 // pred_check_branch
      %15 = sbr.rel (0) target = $region9
    $region8: #{tpu_custom_call.1} parent=1 // pred_region
      _
    $region9: #{tpu_custom_call.1} parent=1 // pred_fallthru
      _
    // Predicated region
    $region10: #{tpu_custom_call.1} parent=1 // pred_check
      _
    $region11: #{tpu_custom_call.1} parent=1 // pred_check_branch
      %17 = sbr.rel (0) target = $region13
    $region12: #{tpu_custom_call.1} parent=1 // pred_region
      _
    $region13: #{tpu_custom_call.1} parent=1 // pred_fallthru
      _
    // Predicated region
    $region14: #{tpu_custom_call.1} parent=1 // pred_check
      _
    $region15: #{tpu_custom_call.1} parent=1 // pred_check_branch
      %19 = sbr.rel (0) target = $region17
    $region16: #{tpu_custom_call.1} parent=1 // pred_region
      _
    $region17: #{tpu_custom_call.1} parent=1 // pred_fallthru
      _
    // Predicated region
    $region18: #{tpu_custom_call.1} parent=1 // pred_check
      _
    $region19: #{tpu_custom_call.1} parent=1 // pred_check_branch
      %21 = sbr.rel (0) target = $region21
    $region20: #{tpu_custom_call.1} parent=1 // pred_region
      _
    $region21: #{tpu_custom_call.1} parent=1 // pred_fallthru
      _
    %v22 = vld [vmem:[%s0] sm:$0xff]
    %v23 = vld [vmem:[%s0 + $0x8] sm:$0xff]
    %v24 = vld [vmem:[%s0 + $0x10] sm:$0xff]
    %v25 = vld [vmem:[%s0 + $0x18] sm:$0xff]
    %v26 = vld [vmem:[%s0 + $0x20] sm:$0xff]
    %v27 = vld [vmem:[%s0 + $0x28] sm:$0xff]
    %v28 = vld [vmem:[%s0 + $0x30] sm:$0xff]
    %v29 = vld [vmem:[%s0 + $0x38] sm:$0xff]
    %v30 = vld [vmem:[%s0 + $0x40] sm:$0xff]
    %v31 = vld [vmem:[%s0 + $0x48] sm:$0xff]
    %v32 = vld [vmem:[%s0 + $0x50] sm:$0xff]
    %v33 = vld [vmem:[%s0 + $0x58] sm:$0xff]
    %v34 = vld [vmem:[%s0 + $0x60] sm:$0xff]
    %v35 = vld [vmem:[%s0 + $0x68] sm:$0xff]
    %v36 = vld [vmem:[%s0 + $0x70] sm:$0xff]
    %v37 = vld [vmem:[%s0 + $0x78] sm:$0xff]
    %v38 = vpack.c.bf16 %v23, %v22
    %v39 = vpack.c.bf16 %v25, %v24
    %v40 = vpack.c.bf16 %v27, %v26
    %v41 = vpack.c.bf16 %v29, %v28
    %v42 = vpack.c.bf16 %v31, %v30
    %v43 = vpack.c.bf16 %v33, %v32
    %v44 = vpack.c.bf16 %v35, %v34
    %v45 = vpack.c.bf16 %v37, %v36
    %v46 = vld [vmem:[%s1] sm:$0xf]
    %v47 = vld [vmem:[%s1 + $0x4] sm:$0xf]
    %v48 = vld [vmem:[%s1 + $0x8] sm:$0xf]
    %v49 = vld [vmem:[%s1 + $0xc] sm:$0xf]
    %v50 = vld [vmem:[%s2] sm:$0xff]
    %v51 = vld [vmem:[%s2 + $0x8] sm:$0xff]
    %v52 = vld [vmem:[%s2 + $0x10] sm:$0xff]
    %v53 = vld [vmem:[%s2 + $0x18] sm:$0xff]
    %55 = vset.pattern.permute.xlu0 0
    %56 = vperm.xlu0 %55, %v50
    %v57 = vpop.permute.xlu0 %56
    %60 = vset.pattern.permute.xlu0 0
    %61 = vperm.xlu0 %60, %v51
    %v62 = vpop.permute.xlu0 %61
    %65 = vset.pattern.permute.xlu0 0
    %66 = vperm.xlu0 %65, %v52
    %v67 = vpop.permute.xlu0 %66
    %70 = vset.pattern.permute.xlu0 0
    %71 = vperm.xlu0 %70, %v53
    %v72 = vpop.permute.xlu0 %71
    %v78 = vunpack.c.l.b16 %v46
    %v79 = vunpack.c.l.b16 %v47
    %v80 = vunpack.c.l.b16 %v48
    %v81 = vunpack.c.l.b16 %v49
    %v82 = vpack.c.b16 %v79, %v78
    %v83 = vpack.c.b16 %v81, %v80
    %vm84 = vcmask 80896
    %v86 = vsel %vm84, %v82, 0
    %v89 = vsel %vm84, %v83, 0
    %v92 = vsel %vm84, %v38, 0
    %v95 = vsel %vm84, %v39, 0
    %v98 = vsel %vm84, %v40, 0
    %v101 = vsel %vm84, %v41, 0
    %v104 = vsel %vm84, %v42, 0
    %v107 = vsel %vm84, %v43, 0
    %v110 = vsel %vm84, %v44, 0
    %v113 = vsel %vm84, %v45, 0
    %115 = vmatpush.bf16.xpose.msra.mxu0 %v113
    %116 = vmatpush.bf16.xpose.msra.mxu0 %v110
    %117 = vmatpush.bf16.xpose.msra.mxu0 %v107
    %118 = vmatpush.bf16.xpose.msra.mxu0 %v104
    %119 = vmatpush.bf16.xpose.msra.mxu0 %v101
    %120 = vmatpush.bf16.xpose.msra.mxu0 %v98
    %121 = vmatpush.bf16.xpose.msra.mxu0 %v95
    %122 = vmatpush.bf16.xpose.msra.mxu0 %v92
    %123 = vmatmul.bf16.gmra.mxu0 %v86
    %v124 = vpop.f32.mrf.mxu0
    %v125 = vadd.f32 %v57, %v124
    %v126 = vpop.f32.mrf.mxu0
    %v127 = vadd.f32 %v62, %v126
    %128 = vmatmul.bf16.gmra.mxu0 %v89
    %v129 = vpop.f32.mrf.mxu0
    %v130 = vadd.f32 %v67, %v129
    %v131 = vpop.f32.mrf.mxu0
    %v132 = vadd.f32 %v72, %v131
    %133 = vdwg.mxu0
    %v134 = vmax.f32 %v125, 0.0
    %v135 = vmax.f32 %v127, 0.0
    %v136 = vmax.f32 %v130, 0.0
    %v137 = vmax.f32 %v132, 0.0
    %v138 = vld [vmem:[%s3] sm:$0xff]
    %v139 = vld [vmem:[%s3 + $0x8] sm:$0xff]
    %v140 = vld [vmem:[%s3 + $0x10] sm:$0xff]
    %v141 = vld [vmem:[%s3 + $0x18] sm:$0xff]
    %143 = vset.pattern.permute.xlu0 0
    %144 = vperm.xlu0 %143, %v138
    %v145 = vpop.permute.xlu0 %144
    %148 = vset.pattern.permute.xlu0 0
    %149 = vperm.xlu0 %148, %v139
    %v150 = vpop.permute.xlu0 %149
    %153 = vset.pattern.permute.xlu0 0
    %154 = vperm.xlu0 %153, %v140
    %v155 = vpop.permute.xlu0 %154
    %158 = vset.pattern.permute.xlu0 0
    %159 = vperm.xlu0 %158, %v141
    %v160 = vpop.permute.xlu0 %159
    %v162 = vmul.f32 %v134, %v145
    %v163 = vmul.f32 %v135, %v150
    %v164 = vmul.f32 %v136, %v155
    %v165 = vmul.f32 %v137, %v160
    %v166 = vadd.f32 %v162, %v163
    %v167 = vadd.f32 %v166, %v164
    %v168 = vadd.f32 %v167, %v165
    %v169 = vrot.slane %v168, 4
    %v170 = vadd.f32 %v168, %v169
    %v171 = vrot.slane %v170, 2
    %v172 = vadd.f32 %v170, %v171
    %v173 = vrot.slane %v172, 1
    %v174 = vadd.f32 %v172, %v173
    %s175 = sld [smem:[#allocation2]]
    %v176 = vstv %s175
    %v177 = vadd.f32 %v174, %v176
    %178 = vst [vmem:[#allocation3] sm:$0x1] %v177
    // Predicated region
    $region22: #{tpu_custom_call.1} parent=1 // pred_check
      _
    $region23: #{tpu_custom_call.1} parent=1 // pred_check_branch
      %180 = sbr.rel (0) target = $region25
    $region24: #{tpu_custom_call.1} parent=1 // pred_region
      %182 = vsyncadd [#allocation4], 0
      %s184 = sshll.u32 [#allocation3], 4
      %s185 = int_to_ptr.vmem [resolvable:$true] %s184
      %s186 = sshll.u32 %s5, 4
      %s187 = int_to_ptr.hbm [resolvable:$true] %s186
      %189 = dma.vmem_to_hbm [thread:$0]  %s185, 16, %s187, [#allocation4]
    $region25: #{tpu_custom_call.1} parent=1 // pred_fallthru
      _
    // Predicated region
    $region26: #{tpu_custom_call.1} parent=1 // pred_check
      _
    $region27: #{tpu_custom_call.1} parent=1 // pred_check_branch
      %191 = sbr.rel (0) target = $region29
    $region28: #{tpu_custom_call.1} parent=1 // pred_region
      %193 = dma.done [#allocation4], 16
    $region29: #{tpu_custom_call.1} parent=1 // pred_fallthru
      _
    %194 = vsyncpa [#allocation4], 1

</llo_original>
